<compile_context>
chip_gen: v7x
topology: tpu7x:2x2x1
jax: 0.10.0
libtpu: 0.0.40
codegen_flags: <defaults>
</compile_context>

<pallas_src>
import functools

import jax
import jax.numpy as jnp
from jax.experimental import pallas as pl
from jax.experimental.pallas import tpu as pltpu


def _round_up(x, m):
    return (x + m - 1) // m * m


def _pad_lanes(x, dp):
    d = x.shape[-1]
    if d == dp:
        return x
    return jnp.pad(x, [(0, 0)] * (x.ndim - 1) + [(0, dp - d)])


def _pick_tq(nq_pad):
    """Query tile (lane) width: whole thing if small, else a divisor <= 512."""
    if nq_pad <= 512:
        return nq_pad
    for tq in (512, 384, 256, 128):
        if nq_pad % tq == 0:
            return tq
    return 128


def _agent_kernel(glabels_ref, support_ref, query_ref, w1_ref, pp_ref, out_ref,
                  *, bs, n_way, feature_dim, normalize, mxu_dtype):
    # glabels_ref : (1, C)  i32   global label = task*n_way + class, C=bs*n_support
    # support_ref : (C, Dp) f32   lane-padded, rows flattened task-major
    # query_ref   : (bs, Dp, TQ) f32   pre-transposed, lane = query index
    # w1_ref      : (Dp, 128) f32      fc1 weight, pre-transposed + padded
    # pp_ref      : (2+2*n_way, 128) f32 packed small params:
    #                 row 0 = fc1 bias, [1,0] = scale,
    #                 [2:2+n_way, 0] = bn gamma, [2+n_way:2+2n_way, 0] = bn beta
    # out_ref     : (bs, n_way, TQ) f32 (lane-dense in query)
    R = bs * n_way
    C = support_ref.shape[0]
    H = w1_ref.shape[1]                                   # 128

    # ---- block-diagonal one-hot^T built in-kernel (iota + compare) ----------
    row_ids = jax.lax.broadcasted_iota(jnp.int32, (R, C), 0)
    onehot_t = (glabels_ref[...] == row_ids).astype(jnp.float32)     # (R, C)
    counts = jnp.sum(onehot_t, axis=1, keepdims=True)                # (R, 1)
    inv_counts = pl.reciprocal(counts, approx=True)                  # EUP, ~2^-12

    # ---- prototypes: ONE flattened (R,C)@(C,Dp) MXU matmul ------------------
    protos = jnp.dot(onehot_t.astype(mxu_dtype),
                     support_ref[...].astype(mxu_dtype),
                     preferred_element_type=jnp.float32) * inv_counts  # (R,Dp) f32

    # ---- fc1 (+bias): ONE flattened (R,Dp)@(Dp,128) matmul ------------------
    b1 = pp_ref[0:1, :]                                              # (1, H)
    h = jnp.dot(protos.astype(mxu_dtype), w1_ref[...].astype(mxu_dtype),
                preferred_element_type=jnp.float32) + b1             # (R, H) f32

    # ---- BatchNorm1d(n_way), training-mode batch stats over (bs, H) ---------
    # TODO(synk): running-stats update / eval-mode BN is not modeled.
    inv_n = 1.0 / float(bs * H)
    row_sum = jnp.sum(h, axis=1, keepdims=True)                      # (R, 1)
    mean_w = jnp.sum(row_sum.reshape(bs, n_way, 1), axis=0,
                     keepdims=True) * inv_n                          # (1,n_way,1)
    mean_row = jnp.broadcast_to(mean_w, (bs, n_way, 1)).reshape(R, 1)
    centered = h - mean_row                                          # (R, H)
    row_sq = jnp.sum(centered * centered, axis=1, keepdims=True)     # (R, 1)
    var_w = jnp.sum(row_sq.reshape(bs, n_way, 1), axis=0,
                    keepdims=True) * inv_n                           # (1,n_way,1)
    gamma = pp_ref[2:2 + n_way, 0:1]                                 # (n_way, 1)
    beta = pp_ref[2 + n_way:2 + 2 * n_way, 0:1]                      # (n_way, 1)
    a_w = gamma * jax.lax.rsqrt(var_w + 1e-5)                        # (1,n_way,1)
    a_row = jnp.broadcast_to(a_w, (bs, n_way, 1)).reshape(R, 1)
    b_row = jnp.broadcast_to(beta[None], (bs, n_way, 1)).reshape(R, 1)
    h_bn = centered * a_row + b_row                                  # (R, H)

    constraint = (jnp.sum(jax.nn.sigmoid(h_bn), axis=1, keepdims=True)
                  * (1.0 / float(H)))                                # (R, 1)
    constraint3 = constraint.reshape(bs, n_way, 1)

    # ---- squared distances in Gram form, lane-dense in the query axis -------
    q = query_ref[...]                                               # (bs,Dp,TQ) f32
    q_sq = jnp.sum(q * q, axis=1, keepdims=True)                     # (bs,1,TQ)
    p_sq = jnp.sum(protos * protos, axis=1,
                   keepdims=True).reshape(bs, n_way, 1)              # (bs,n_way,1)
    cross = jax.lax.dot_general(                                     # canonical MXU
        protos.reshape(bs, n_way, -1).astype(mxu_dtype),
        q.astype(mxu_dtype),
        dimension_numbers=(((2,), (1,)), ((0,), (0,))),
        preferred_element_type=jnp.float32)                          # (bs,n_way,TQ)

    dist = jnp.maximum(p_sq + q_sq - 2.0 * cross, 0.0)               # parity: >= 0
    if normalize:
        dist = dist * (1.0 / float(feature_dim))                     # original D

    # Reference uses exp(+distance - constraint); kept as-is for parity.
    logits = jnp.exp(dist - constraint3)
    out_ref[...] = logits * pp_ref[1:2, 0:1]                         # scale bcast


def agent_forward(params, support, query, support_labels, n_way, n_shot,
                  normalize=True, mxu_dtype=jnp.bfloat16):
    """Pallas implementation of Agent.forward."""
    bs, n_support, feature_dim = support.shape
    n_query = query.shape[1]
    assert n_support == n_way * n_shot

    dp = _round_up(feature_dim, 128)       # lane-dense feature dim
    nq_pad = _round_up(n_query, 128)       # lane-dense query dim
    tq = _pick_tq(nq_pad)
    C = bs * n_support
    R = bs * n_way

    # Glue (cheap/fusible XLA): lane-pad + flatten support, transpose + pad
    # query to (bs, Dp, NQpad), fold (task, class) into one global label id.
    support_p = _pad_lanes(support, dp).reshape(C, dp)
    query_t = jnp.transpose(query, (0, 2, 1))                        # (bs, D, nq)
    query_t = jnp.pad(query_t, ((0, 0), (0, dp - feature_dim),
                                (0, nq_pad - n_query)))
    glabels = (support_labels.astype(jnp.int32)
               + n_way * jnp.arange(bs, dtype=jnp.int32)[:, None]).reshape(1, C)

    w1 = params['fc1_w_t']                              # (Dp, 128), pre-padded
    if w1.shape[0] != dp:
        w1 = jnp.pad(w1, ((0, dp - w1.shape[0]), (0, 0)))
    hidden = w1.shape[1]

    # Coalesce the small f32 params into ONE packed VMEM tile (fewer DMAs).
    P = 2 + 2 * n_way
    small = jnp.zeros((P, hidden), jnp.float32)
    small = small.at[0, :].set(params['fc1_b'])
    small = small.at[1, 0].set(params['scale'].reshape(()))
    small = small.at[2:2 + n_way, 0].set(params['bn_gamma'])
    small = small.at[2 + n_way:2 + 2 * n_way, 0].set(params['bn_beta'])

    kernel = functools.partial(_agent_kernel, bs=bs, n_way=n_way,
                               feature_dim=feature_dim, normalize=normalize,
                               mxu_dtype=mxu_dtype)

    # Size the scoped-VMEM limit to the actual tiles (defaults: 16/32/32 MiB).
    est = 4 * (C * dp + dp * hidden + P * hidden + C
               + 2 * (bs * dp * tq + bs * n_way * tq)        # dbl-buffered I/O
               + R * (C + 3 * dp + 4 * hidden)               # temporaries
               + bs * tq + 3 * bs * n_way * tq)
    vmem_limit = int(min(60 * 2**20, max(32 * 2**20, 3 * est)))

    out = pl.pallas_call(
        kernel,
        out_shape=jax.ShapeDtypeStruct((bs, n_way, nq_pad), jnp.float32),
        grid=(nq_pad // tq,),
        in_specs=[
            pl.BlockSpec((1, C), lambda i: (0, 0)),              # glabels
            pl.BlockSpec((C, dp), lambda i: (0, 0)),             # support
            pl.BlockSpec((bs, dp, tq), lambda i: (0, 0, i)),     # query tile
            pl.BlockSpec((dp, hidden), lambda i: (0, 0)),        # fc1 weight
            pl.BlockSpec((P, hidden), lambda i: (0, 0)),         # packed params
        ],
        out_specs=pl.BlockSpec((bs, n_way, tq), lambda i: (0, 0, i)),
        compiler_params=pltpu.CompilerParams(
            dimension_semantics=("parallel",),
            vmem_limit_bytes=vmem_limit),
    )(glabels, support_p, query_t, w1, small)

    # Lane-dense kernel output is (bs, n_way, NQpad); restore the module's
    # (bs, n_query, n_way) layout and drop the query padding in XLA.
    return jnp.transpose(out, (0, 2, 1))[:, :n_query, :]


def init_params(key, n_way, feature_dim, hidden=128):
    k1, k2 = jax.random.split(key)
    dp = _round_up(feature_dim, 128)
    w = 0.1 * jax.random.normal(k1, (hidden, feature_dim), jnp.float32)  # torch layout
    # fc1 weight stored pre-transposed (D,128) and lane-padded (Dp,128); padded
    # rows are zero (no-op against zero-padded proto lanes).
    w_t = jnp.zeros((dp, hidden), jnp.float32).at[:feature_dim, :].set(w.T)
    return {
        'fc1_w_t': w_t,
        'fc1_b': 0.01 * jax.random.normal(k2, (hidden,), jnp.float32),
        'bn_gamma': jnp.ones((n_way,), jnp.float32),
        'bn_beta': jnp.zeros((n_way,), jnp.float32),
        'scale': jnp.ones((1,), jnp.float32),
    }
    # fc2 / mask / lr parameters of the PyTorch module are unused in forward.


def _agent_reference(params, support, query, support_labels, n_way, n_shot,
                     normalize=True):
    """Pure-JAX transcription of the PyTorch Agent.forward (for validation)."""
    bs, n_support, d = support.shape
    oh_t = jnp.transpose(jax.nn.one_hot(support_labels, n_way, dtype=jnp.float32),
                         (0, 2, 1))                                  # (bs,n_way,ns)
    protos = jnp.einsum('bws,bsd->bwd', oh_t, support)
    protos = protos / jnp.sum(oh_t, axis=2, keepdims=True)
    w_t = params['fc1_w_t'][:d, :]                                   # (D, 128)
    h = jnp.einsum('bwd,dh->bwh', protos, w_t) + params['fc1_b']
    mean = jnp.mean(h, axis=(0, 2), keepdims=True)
    var = jnp.mean((h - mean) ** 2, axis=(0, 2), keepdims=True)
    h = (h - mean) / jnp.sqrt(var + 1e-5)
    h = h * params['bn_gamma'][None, :, None] + params['bn_beta'][None, :, None]
    constraint = jnp.mean(jax.nn.sigmoid(h), axis=-1)                # (bs, n_way)
    diff = query[:, :, None, :] - protos[:, None, :, :]
    logits = jnp.sum(diff * diff, axis=-1)
    if normalize:
        logits = logits / d
    logits = jnp.exp(logits - constraint[:, None, :])
    return params['scale'] * logits


if __name__ == "__main__":
    bs, n_way, n_shot, n_query, feature_dim = 2, 4, 2, 8, 32
    n_support = n_way * n_shot

    key = jax.random.PRNGKey(0)
    kp, ks, kq = jax.random.split(key, 3)

    params = init_params(kp, n_way, feature_dim)
    support = jax.random.normal(ks, (bs, n_support, feature_dim), jnp.float32)
    query = jax.random.normal(kq, (bs, n_query, feature_dim), jnp.float32)
    # each class appears n_shot times per task (per-class counts > 0)
    support_labels = jnp.tile(jnp.arange(n_way, dtype=jnp.int32), (bs, n_shot))

    ref = _agent_reference(params, support, query, support_labels, n_way, n_shot,
                           normalize=True)

    # f32-MXU path: tight parity with the f32 reference.
    out_f32 = agent_forward(params, support, query, support_labels, n_way, n_shot,
                            normalize=True, mxu_dtype=jnp.float32)
    jax.block_until_ready(out_f32)
    assert out_f32.shape == (bs, n_query, n_way)
    assert jnp.allclose(out_f32, ref, rtol=5e-3, atol=1e-4), \
        float(jnp.max(jnp.abs(out_f32 - ref)))

    # default bf16-MXU path (native on v6e/v7x): looser tolerance.
    out_bf16 = agent_forward(params, support, query, support_labels, n_way, n_shot,
                             normalize=True)
    jax.block_until_ready(out_bf16)
    assert out_bf16.shape == (bs, n_query, n_way)
    assert jnp.allclose(out_bf16, ref, rtol=2e-2, atol=2e-3), \
        float(jnp.max(jnp.abs(out_bf16 - ref)))

    print("KERNEL_OK")
</pallas_src>

<mosaic_0001>
module attributes {stable_mosaic.version = 11 : i64} {
  func.func @_agent_kernel(%arg0: i32, %arg1: memref<1x16xi32, #tpu.memory_space<vmem>>, %arg2: memref<16x128xf32, #tpu.memory_space<vmem>>, %arg3: memref<2x128x128xf32, #tpu.memory_space<vmem>>, %arg4: memref<128x128xf32, #tpu.memory_space<vmem>>, %arg5: memref<10x128xf32, #tpu.memory_space<vmem>>, %arg6: memref<2x4x128xf32, #tpu.memory_space<vmem>>) attributes {dimension_semantics = [#tpu.dimension_semantics<parallel>], iteration_bounds = array<i64: 1>, scalar_prefetch = 0 : i64, scratch_operands = 0 : i64, tpu.core_type = #tpu.core_type<tc>, window_params = [{pipeline_mode = #tpu.pipeline_mode<synchronous>, transform_indices = @transform_0, window_bounds = array<i64: 1, 16>}, {pipeline_mode = #tpu.pipeline_mode<synchronous>, transform_indices = @transform_1, window_bounds = array<i64: 16, 128>}, {transform_indices = @transform_2, window_bounds = array<i64: 2, 128, 128>}, {pipeline_mode = #tpu.pipeline_mode<synchronous>, transform_indices = @transform_3, window_bounds = array<i64: 128, 128>}, {pipeline_mode = #tpu.pipeline_mode<synchronous>, transform_indices = @transform_4, window_bounds = array<i64: 10, 128>}, {transform_indices = @transform_5, window_bounds = array<i64: 2, 4, 128>}]} {
    %0 = tpu.iota {dimensions = array<i32: 0>} : vector<8x16xi32>
    %c0 = arith.constant 0 : index
    %c0_0 = arith.constant 0 : index
    %1 = vector.load %arg1[%c0, %c0_0] : memref<1x16xi32, #tpu.memory_space<vmem>>, vector<1x16xi32>
    %2 = vector.broadcast %1 : vector<1x16xi32> to vector<8x16xi32>
    %3 = arith.cmpi eq, %2, %0 : vector<8x16xi32>
    %4 = arith.extui %3 : vector<8x16xi1> to vector<8x16xi32>
    %5 = arith.sitofp %4 : vector<8x16xi32> to vector<8x16xf32>
    %cst = arith.constant dense<0.000000e+00> : vector<8xf32>
    %6 = vector.multi_reduction <add>, %5, %cst [1] : vector<8x16xf32> to vector<8xf32>
    %7 = vector.shape_cast %6 : vector<8xf32> to vector<8x1xf32>
    %8 = tpu.reciprocal %7 {approx = true} : vector<8x1xf32> -> vector<8x1xf32>
    %c0_1 = arith.constant 0 : index
    %c0_2 = arith.constant 0 : index
    %9 = vector.load %arg2[%c0_1, %c0_2] : memref<16x128xf32, #tpu.memory_space<vmem>>, vector<16x128xf32>
    %cst_3 = arith.constant dense<0.000000e+00> : vector<8x128xf32>
    %10 = tpu.matmul %5, %9, %cst_3 {dimension_numbers = #tpu.dot_dimension_numbers<[1], [0], [0], [1], [0, 0, 1, 1], [], []>} : vector<8x16xf32>, vector<16x128xf32>, vector<8x128xf32> -> vector<8x128xf32>
    %11 = vector.broadcast %8 : vector<8x1xf32> to vector<8x128xf32>
    %12 = arith.mulf %10, %11 : vector<8x128xf32>
    %c0_4 = arith.constant 0 : index
    %c0_5 = arith.constant 0 : index
    %13 = vector.load %arg5[%c0_4, %c0_5] : memref<10x128xf32, #tpu.memory_space<vmem>>, vector<1x128xf32>
    %c0_6 = arith.constant 0 : index
    %c0_7 = arith.constant 0 : index
    %14 = vector.load %arg4[%c0_6, %c0_7] : memref<128x128xf32, #tpu.memory_space<vmem>>, vector<128x128xf32>
    %cst_8 = arith.constant dense<0.000000e+00> : vector<8x128xf32>
    %15 = tpu.matmul %12, %14, %cst_8 {dimension_numbers = #tpu.dot_dimension_numbers<[1], [0], [0], [1], [0, 0, 1, 1], [], []>} : vector<8x128xf32>, vector<128x128xf32>, vector<8x128xf32> -> vector<8x128xf32>
    %16 = vector.broadcast %13 : vector<1x128xf32> to vector<8x128xf32>
    %17 = arith.addf %15, %16 : vector<8x128xf32>
    %cst_9 = arith.constant dense<0.000000e+00> : vector<8xf32>
    %18 = vector.multi_reduction <add>, %17, %cst_9 [1] : vector<8x128xf32> to vector<8xf32>
    %19 = vector.shape_cast %18 : vector<8xf32> to vector<8x1xf32>
    %20 = vector.shape_cast %19 : vector<8x1xf32> to vector<2x4x1xf32>
    %cst_10 = arith.constant dense<0.000000e+00> : vector<4x1xf32>
    %21 = vector.multi_reduction <add>, %20, %cst_10 [0] : vector<2x4x1xf32> to vector<4x1xf32>
    %22 = vector.shape_cast %21 : vector<4x1xf32> to vector<1x4x1xf32>
    %cst_11 = arith.constant 3.906250e-03 : f32
    %23 = vector.broadcast %cst_11 : f32 to vector<1x4x1xf32>
    %24 = arith.mulf %22, %23 : vector<1x4x1xf32>
    %25 = vector.shape_cast %24 : vector<1x4x1xf32> to vector<1x4x1xf32>
    %26 = vector.broadcast %25 : vector<1x4x1xf32> to vector<2x4x1xf32>
    %27 = vector.shape_cast %26 : vector<2x4x1xf32> to vector<8x1xf32>
    %28 = vector.broadcast %27 : vector<8x1xf32> to vector<8x128xf32>
    %29 = arith.subf %17, %28 : vector<8x128xf32>
    %30 = arith.mulf %29, %29 : vector<8x128xf32>
    %cst_12 = arith.constant dense<0.000000e+00> : vector<8xf32>
    %31 = vector.multi_reduction <add>, %30, %cst_12 [1] : vector<8x128xf32> to vector<8xf32>
    %32 = vector.shape_cast %31 : vector<8xf32> to vector<8x1xf32>
    %33 = vector.shape_cast %32 : vector<8x1xf32> to vector<2x4x1xf32>
    %cst_13 = arith.constant dense<0.000000e+00> : vector<4x1xf32>
    %34 = vector.multi_reduction <add>, %33, %cst_13 [0] : vector<2x4x1xf32> to vector<4x1xf32>
    %35 = vector.shape_cast %34 : vector<4x1xf32> to vector<1x4x1xf32>
    %cst_14 = arith.constant 3.906250e-03 : f32
    %36 = vector.broadcast %cst_14 : f32 to vector<1x4x1xf32>
    %37 = arith.mulf %35, %36 : vector<1x4x1xf32>
    %c2 = arith.constant 2 : index
    %c0_15 = arith.constant 0 : index
    %38 = vector.load %arg5[%c2, %c0_15] : memref<10x128xf32, #tpu.memory_space<vmem>>, vector<4x1xf32>
    %c6 = arith.constant 6 : index
    %c0_16 = arith.constant 0 : index
    %39 = vector.load %arg5[%c6, %c0_16] : memref<10x128xf32, #tpu.memory_space<vmem>>, vector<4x1xf32>
    %cst_17 = arith.constant 9.99999974E-6 : f32
    %40 = vector.broadcast %cst_17 : f32 to vector<1x4x1xf32>
    %41 = arith.addf %37, %40 : vector<1x4x1xf32>
    %42 = math.rsqrt %41 : vector<1x4x1xf32>
    %43 = vector.shape_cast %38 : vector<4x1xf32> to vector<1x4x1xf32>
    %44 = arith.mulf %43, %42 : vector<1x4x1xf32>
    %45 = vector.shape_cast %44 : vector<1x4x1xf32> to vector<1x4x1xf32>
    %46 = vector.broadcast %45 : vector<1x4x1xf32> to vector<2x4x1xf32>
    %47 = vector.shape_cast %46 : vector<2x4x1xf32> to vector<8x1xf32>
    %48 = vector.shape_cast %39 : vector<4x1xf32> to vector<1x4x1xf32>
    %49 = vector.shape_cast %48 : vector<1x4x1xf32> to vector<1x4x1xf32>
    %50 = vector.broadcast %49 : vector<1x4x1xf32> to vector<2x4x1xf32>
    %51 = vector.shape_cast %50 : vector<2x4x1xf32> to vector<8x1xf32>
    %52 = vector.broadcast %47 : vector<8x1xf32> to vector<8x128xf32>
    %53 = arith.mulf %29, %52 : vector<8x128xf32>
    %54 = vector.broadcast %51 : vector<8x1xf32> to vector<8x128xf32>
    %55 = arith.addf %53, %54 : vector<8x128xf32>
    %56 = arith.negf %55 : vector<8x128xf32>
    %57 = math.exp %56 : vector<8x128xf32>
    %cst_18 = arith.constant 1.000000e+00 : f32
    %58 = vector.broadcast %cst_18 : f32 to vector<8x128xf32>
    %59 = arith.addf %58, %57 : vector<8x128xf32>
    %60 = arith.divf %58, %59 : vector<8x128xf32>
    %cst_19 = arith.constant dense<0.000000e+00> : vector<8xf32>
    %61 = vector.multi_reduction <add>, %60, %cst_19 [1] : vector<8x128xf32> to vector<8xf32>
    %62 = vector.shape_cast %61 : vector<8xf32> to vector<8x1xf32>
    %cst_20 = arith.constant 7.812500e-03 : f32
    %63 = vector.broadcast %cst_20 : f32 to vector<8x1xf32>
    %64 = arith.mulf %62, %63 : vector<8x1xf32>
    %65 = vector.shape_cast %64 : vector<8x1xf32> to vector<2x4x1xf32>
    %c0_21 = arith.constant 0 : index
    %c0_22 = arith.constant 0 : index
    %c0_23 = arith.constant 0 : index
    %66 = vector.load %arg3[%c0_21, %c0_22, %c0_23] : memref<2x128x128xf32, #tpu.memory_space<vmem>>, vector<2x128x128xf32>
    %67 = arith.mulf %66, %66 : vector<2x128x128xf32>
    %cst_24 = arith.constant dense<0.000000e+00> : vector<2x128xf32>
    %68 = vector.multi_reduction <add>, %67, %cst_24 [1] : vector<2x128x128xf32> to vector<2x128xf32>
    %69 = vector.shape_cast %68 : vector<2x128xf32> to vector<2x1x128xf32>
    %70 = arith.mulf %12, %12 : vector<8x128xf32>
    %cst_25 = arith.constant dense<0.000000e+00> : vector<8xf32>
    %71 = vector.multi_reduction <add>, %70, %cst_25 [1] : vector<8x128xf32> to vector<8xf32>
    %72 = vector.shape_cast %71 : vector<8xf32> to vector<8x1xf32>
    %73 = vector.shape_cast %72 : vector<8x1xf32> to vector<2x4x1xf32>
    %74 = vector.shape_cast %12 : vector<8x128xf32> to vector<2x4x128xf32>
    %cst_26 = arith.constant dense<0.000000e+00> : vector<2x4x128xf32>
    %75 = tpu.matmul %74, %66, %cst_26 {dimension_numbers = #tpu.dot_dimension_numbers<[2], [1], [1], [2], [0, 0, 0, 1, 1, 2], [0], [0]>} : vector<2x4x128xf32>, vector<2x128x128xf32>, vector<2x4x128xf32> -> vector<2x4x128xf32>
    %76 = vector.broadcast %73 : vector<2x4x1xf32> to vector<2x4x128xf32>
    %77 = vector.broadcast %69 : vector<2x1x128xf32> to vector<2x4x128xf32>
    %78 = arith.addf %76, %77 : vector<2x4x128xf32>
    %cst_27 = arith.constant 2.000000e+00 : f32
    %79 = vector.broadcast %cst_27 : f32 to vector<2x4x128xf32>
    %80 = arith.mulf %79, %75 : vector<2x4x128xf32>
    %81 = arith.subf %78, %80 : vector<2x4x128xf32>
    %cst_28 = arith.constant 0.000000e+00 : f32
    %82 = vector.broadcast %cst_28 : f32 to vector<2x4x128xf32>
    %83 = arith.maximumf %81, %82 : vector<2x4x128xf32>
    %cst_29 = arith.constant 3.125000e-02 : f32
    %84 = vector.broadcast %cst_29 : f32 to vector<2x4x128xf32>
    %85 = arith.mulf %83, %84 : vector<2x4x128xf32>
    %86 = vector.broadcast %65 : vector<2x4x1xf32> to vector<2x4x128xf32>
    %87 = arith.subf %85, %86 : vector<2x4x128xf32>
    %88 = math.exp %87 : vector<2x4x128xf32>
    %c1 = arith.constant 1 : index
    %c0_30 = arith.constant 0 : index
    %89 = vector.load %arg5[%c1, %c0_30] : memref<10x128xf32, #tpu.memory_space<vmem>>, vector<1x1xf32>
    %90 = vector.shape_cast %89 : vector<1x1xf32> to vector<1x1x1xf32>
    %91 = vector.broadcast %90 : vector<1x1x1xf32> to vector<2x4x128xf32>
    %92 = arith.mulf %88, %91 : vector<2x4x128xf32>
    %c0_31 = arith.constant 0 : index
    %c0_32 = arith.constant 0 : index
    %c0_33 = arith.constant 0 : index
    %93 = vector.load %arg6[%c0_31, %c0_32, %c0_33] : memref<2x4x128xf32, #tpu.memory_space<vmem>>, vector<2x4x128xf32>
    tpu.vector_store %arg6[%c0_31, %c0_32, %c0_33], %92 {strides = array<i32>} : memref<2x4x128xf32, #tpu.memory_space<vmem>>, vector<2x4x128xf32>,
    return
  }
  func.func @transform_0(%arg0: i32) -> (i32, i32) {
    %c0_i32 = arith.constant 0 : i32
    %c0_i32_0 = arith.constant 0 : i32
    %c0_i32_1 = arith.constant 0 : i32
    return %c0_i32, %c0_i32_0 : i32, i32
  }
  func.func @transform_1(%arg0: i32) -> (i32, i32) {
    %c0_i32 = arith.constant 0 : i32
    %c0_i32_0 = arith.constant 0 : i32
    %c0_i32_1 = arith.constant 0 : i32
    return %c0_i32, %c0_i32_0 : i32, i32
  }
  func.func @transform_2(%arg0: i32) -> (i32, i32, i32) {
    %c0_i32 = arith.constant 0 : i32
    %c0_i32_0 = arith.constant 0 : i32
    %c0_i32_1 = arith.constant 0 : i32
    return %c0_i32, %c0_i32_0, %arg0 : i32, i32, i32
  }
  func.func @transform_3(%arg0: i32) -> (i32, i32) {
    %c0_i32 = arith.constant 0 : i32
    %c0_i32_0 = arith.constant 0 : i32
    %c0_i32_1 = arith.constant 0 : i32
    return %c0_i32, %c0_i32_0 : i32, i32
  }
  func.func @transform_4(%arg0: i32) -> (i32, i32) {
    %c0_i32 = arith.constant 0 : i32
    %c0_i32_0 = arith.constant 0 : i32
    %c0_i32_1 = arith.constant 0 : i32
    return %c0_i32, %c0_i32_0 : i32, i32
  }
  func.func @transform_5(%arg0: i32) -> (i32, i32, i32) {
    %c0_i32 = arith.constant 0 : i32
    %c0_i32_0 = arith.constant 0 : i32
    %c0_i32_1 = arith.constant 0 : i32
    return %c0_i32, %c0_i32_0, %arg0 : i32, i32, i32
  }
}

</mosaic_0001>

<llo_original>
// kernel: tpu_custom_call.1
$region0: #{tpu_custom_call.1}
  #allocation0 [shape = 'u32[]', space=smem, size = 0x4, offset = 0x4, fixed_abs, tag = 'smem constant byte address 0x4 - core index']
  #allocation1 [shape = 'u32[144,128]{1,0:T(1,128)}', space=vmem, size = 0x12000, scoped, tag = 'internal scratch']
  %s0 = inlined_call_operand.hbm [shape: s32[1,16], index: 0, kind: input, shape index: {}]
  %s1 = inlined_call_operand.hbm [shape: f32[16,128], index: 1, kind: input, shape index: {}]
  %s2 = inlined_call_operand.hbm [shape: f32[2,128,128], index: 2, kind: input, shape index: {}]
  %s3 = inlined_call_operand.hbm [shape: f32[128,128], index: 3, kind: input, shape index: {}]
  %s4 = inlined_call_operand.hbm [shape: f32[10,128], index: 4, kind: input, shape index: {}]
  %s5 = inlined_call_operand.hbm [shape: f32[2,4,128], index: 5, kind: output, shape index: {}]
  %s6 = sld [smem:[#allocation0]]
  $region50: #{tpu_custom_call.1} parent=0
    _
  %s8 = ssub.s32 1, %s6
  %s9 = scalar_select 0, %s8, %s6
  $region1: #{tpu_custom_call.1} parent=0
    #allocation2 [shape = 'u8[512]{0}', space=vmem, size = 0x400, scoped, tag = 'input window, operand 0, single buffered']
    #allocation3 [shape = 's32[1]{0}', space=sflag, size = 0x4, scoped, tag = 'scoped memory for tpu_custom_call.1']
    #allocation4 [shape = 's32[1]{0}', space=sflag, size = 0x4, scoped, tag = 'scoped memory for tpu_custom_call.1']
    #allocation5 [shape = 'u8[8192]{0}', space=vmem, size = 0x2000, scoped, tag = 'input window, operand 1, single buffered']
    #allocation6 [shape = 's32[1]{0}', space=sflag, size = 0x4, scoped, tag = 'scoped memory for tpu_custom_call.1']
    #allocation7 [shape = 'u8[131072]{0}', space=vmem, size = 0x20000, scoped, tag = 'input window, operand 2, single buffered']
    #allocation8 [shape = 'u8[65536]{0}', space=vmem, size = 0x10000, scoped, tag = 'input window, operand 3, single buffered']
    #allocation9 [shape = 's32[1]{0}', space=sflag, size = 0x4, scoped, tag = 'scoped memory for tpu_custom_call.1']
    #allocation10 [shape = 'u8[8192]{0}', space=vmem, size = 0x2000, scoped, tag = 'input window, operand 4, single buffered']
    #allocation11 [shape = 'u8[4096]{0}', space=vmem, size = 0x1000, scoped, tag = 'output window, operand 0, single buffered']
    %10 = vsyncpa [#allocation3], 0
    %11 = vsyncpa [#allocation6], 0
    %12 = vsyncpa [#allocation9], 0
    %13 = vsyncpa [#allocation4], 0
    // Predicated region
    $region2: #{tpu_custom_call.1} parent=1 // pred_check
      _
    $region3: #{tpu_custom_call.1} parent=1 // pred_check_branch
      %15 = sbr.rel (0) target = $region5
    $region4: #{tpu_custom_call.1} parent=1 // pred_region
      %s17 = ssub.s32 16, 16
      %18 = vsyncadd [#allocation3], %s17
      %s20 = sshll.u32 [#allocation2], 4
      %s21 = int_to_ptr.vmem [resolvable:$true] %s20
      %23 = dma.hbm_to_vmem [thread:$0]  %s0, 16, %s21, [#allocation3]
    $region5: #{tpu_custom_call.1} parent=1 // pred_fallthru
      _
    // Predicated region
    $region6: #{tpu_custom_call.1} parent=1 // pred_check
      _
    $region7: #{tpu_custom_call.1} parent=1 // pred_check_branch
      %25 = sbr.rel (0) target = $region9
    $region8: #{tpu_custom_call.1} parent=1 // pred_region
      %s27 = ssub.s32 256, 256
      %28 = vsyncadd [#allocation6], %s27
      %s29 = sshll.u32 [#allocation5], 4
      %s30 = int_to_ptr.vmem [resolvable:$true] %s29
      %35 = dma.hbm_to_vmem [thread:$0]  %s1, 256, %s30, [#allocation6], 128, 128, 8
    $region9: #{tpu_custom_call.1} parent=1 // pred_fallthru
      _
    // Predicated region
    $region10: #{tpu_custom_call.1} parent=1 // pred_check
      _
    $region11: #{tpu_custom_call.1} parent=1 // pred_check_branch
      %37 = sbr.rel (0) target = $region13
    $region12: #{tpu_custom_call.1} parent=1 // pred_region
      %s39 = ssub.s32 4096, 4096
      %40 = vsyncadd [#allocation6], %s39
      %s41 = sshll.u32 [#allocation7], 4
      %s42 = int_to_ptr.vmem [resolvable:$true] %s41
      %47 = dma.hbm_to_vmem [thread:$0]  %s2, 4096, %s42, [#allocation6], 128, 128, 8
    $region13: #{tpu_custom_call.1} parent=1 // pred_fallthru
      _
    // Predicated region
    $region14: #{tpu_custom_call.1} parent=1 // pred_check
      _
    $region15: #{tpu_custom_call.1} parent=1 // pred_check_branch
      %49 = sbr.rel (0) target = $region17
    $region16: #{tpu_custom_call.1} parent=1 // pred_region
      %s51 = ssub.s32 2048, 2048
      %52 = vsyncadd [#allocation9], %s51
      %s53 = sshll.u32 [#allocation8], 4
      %s54 = int_to_ptr.vmem [resolvable:$true] %s53
      %59 = dma.hbm_to_vmem [thread:$0]  %s3, 2048, %s54, [#allocation9], 128, 128, 8
    $region17: #{tpu_custom_call.1} parent=1 // pred_fallthru
      _
    // Predicated region
    $region18: #{tpu_custom_call.1} parent=1 // pred_check
      _
    $region19: #{tpu_custom_call.1} parent=1 // pred_check_branch
      %61 = sbr.rel (0) target = $region21
    $region20: #{tpu_custom_call.1} parent=1 // pred_region
      %s63 = ssub.s32 256, 256
      %64 = vsyncadd [#allocation9], %s63
      %s65 = sshll.u32 [#allocation10], 4
      %s66 = int_to_ptr.vmem [resolvable:$true] %s65
      %71 = dma.hbm_to_vmem [thread:$0]  %s4, 256, %s66, [#allocation9], 128, 128, 8
    $region21: #{tpu_custom_call.1} parent=1 // pred_fallthru
      _
    // Predicated region
    $region22: #{tpu_custom_call.1} parent=1 // pred_check
      _
    $region23: #{tpu_custom_call.1} parent=1 // pred_check_branch
      %73 = sbr.rel (0) target = $region25
    $region24: #{tpu_custom_call.1} parent=1 // pred_region
      %74 = dma.done [#allocation3], 16
    $region25: #{tpu_custom_call.1} parent=1 // pred_fallthru
      _
    // Predicated region
    $region26: #{tpu_custom_call.1} parent=1 // pred_check
      _
    $region27: #{tpu_custom_call.1} parent=1 // pred_check_branch
      %76 = sbr.rel (0) target = $region29
    $region28: #{tpu_custom_call.1} parent=1 // pred_region
      %77 = dma.done [#allocation6], 256
    $region29: #{tpu_custom_call.1} parent=1 // pred_fallthru
      _
    // Predicated region
    $region30: #{tpu_custom_call.1} parent=1 // pred_check
      _
    $region31: #{tpu_custom_call.1} parent=1 // pred_check_branch
      %79 = sbr.rel (0) target = $region33
    $region32: #{tpu_custom_call.1} parent=1 // pred_region
      %80 = dma.done [#allocation6], 4096
    $region33: #{tpu_custom_call.1} parent=1 // pred_fallthru
      _
    // Predicated region
    $region34: #{tpu_custom_call.1} parent=1 // pred_check
      _
    $region35: #{tpu_custom_call.1} parent=1 // pred_check_branch
      %82 = sbr.rel (0) target = $region37
    $region36: #{tpu_custom_call.1} parent=1 // pred_region
      %83 = dma.done [#allocation9], 2048
    $region37: #{tpu_custom_call.1} parent=1 // pred_fallthru
      _
    // Predicated region
    $region38: #{tpu_custom_call.1} parent=1 // pred_check
      _
    $region39: #{tpu_custom_call.1} parent=1 // pred_check_branch
      %85 = sbr.rel (0) target = $region41
    $region40: #{tpu_custom_call.1} parent=1 // pred_region
      %86 = dma.done [#allocation9], 256
    $region41: #{tpu_custom_call.1} parent=1 // pred_fallthru
      _
    %v87 = vlaneseq
    %v88 = vshrl.u32 %v87, 7
    %v89 = vld [vmem:[#allocation2] sm:$0x1]
    %v90 = vlaneseq
    %v91 = vshrl.u32 %v90, 7
    %v92 = vsub.s32 0, %v91
    %v93 = vrot.slane %v89, %v92
    %vm94 = vcmp.eq.s32.totalorder %v93, %v88
    %v95 = vsel %vm94, 1, 0
    %v96 = vcvt.s32.f32 %v95
    %vm97 = vcmask 130048
    %v98 = vsel %vm97, %v96, 0.0
    %99 = vadd.xlane.f32.xlu0 %v98
    %v100 = vpop.xlane.xlu0 %99
    %v101 = vrcp.pop %v100
    %v102 = vld [vmem:[#allocation5] sm:$0xff]
    %v103 = vld [vmem:[#allocation5 + $0x8] sm:$0xff]
    %v105 = vsel %vm97, %v96, 0
    %107 = vmatprep.subr.mxu0 0.0
    %108 = vmatpush1.msra.mxu0 %v102
    %109 = vmatprep.subr.mxu0 0.0
    %110 = vmatpush1.msra.mxu0 %v103
    %111 = vmatprep.subr.mxu0 0.0
    %112 = vmatpush1.msra.mxu0 0.0
    %113 = vmatprep.subr.mxu0 0.0
    %114 = vmatpush1.msra.mxu0 0.0
    %115 = vmatprep.subr.mxu0 0.0
    %116 = vmatpush1.msra.mxu0 0.0
    %117 = vmatprep.subr.mxu0 0.0
    %118 = vmatpush1.msra.mxu0 0.0
    %119 = vmatprep.subr.mxu0 0.0
    %120 = vmatpush1.msra.mxu0 0.0
    %121 = vmatprep.subr.mxu0 0.0
    %122 = vmatpush1.msra.mxu0 0.0
    %123 = vmatprep.subr.mxu0 0.0
    %124 = vmatpush1.msra.mxu0 0.0
    %125 = vmatprep.subr.mxu0 0.0
    %126 = vmatpush1.msra.mxu0 0.0
    %127 = vmatprep.subr.mxu0 0.0
    %128 = vmatpush1.msra.mxu0 0.0
    %129 = vmatprep.subr.mxu0 0.0
    %130 = vmatpush1.msra.mxu0 0.0
    %131 = vmatprep.subr.mxu0 0.0
    %132 = vmatpush1.msra.mxu0 0.0
    %133 = vmatprep.subr.mxu0 0.0
    %134 = vmatpush1.msra.mxu0 0.0
    %135 = vmatprep.subr.mxu0 0.0
    %136 = vmatpush1.msra.mxu0 0.0
    %137 = vmatprep.subr.mxu0 0.0
    %138 = vmatpush1.msra.mxu0 0.0
    %139 = vmatprep.subr.mxu0 0.0
    %140 = vmatpush1.msra.mxu0 0.0
    %141 = vmatprep.subr.mxu0 0.0
    %142 = vmatpush1.msra.mxu0 0.0
    %143 = vmatprep.subr.mxu0 0.0
    %144 = vmatpush1.msra.mxu0 0.0
    %145 = vmatprep.subr.mxu0 0.0
    %146 = vmatpush1.msra.mxu0 0.0
    %147 = vmatprep.subr.mxu0 0.0
    %148 = vmatpush1.msra.mxu0 0.0
    %149 = vmatprep.subr.mxu0 0.0
    %150 = vmatpush1.msra.mxu0 0.0
    %151 = vmatprep.subr.mxu0 0.0
    %152 = vmatpush1.msra.mxu0 0.0
    %153 = vmatprep.subr.mxu0 0.0
    %154 = vmatpush1.msra.mxu0 0.0
    %155 = vmatprep.subr.mxu0 0.0
    %156 = vmatpush1.msra.mxu0 0.0
    %157 = vmatprep.subr.mxu0 0.0
    %158 = vmatpush1.msra.mxu0 0.0
    %159 = vmatprep.subr.mxu0 0.0
    %160 = vmatpush1.msra.mxu0 0.0
    %161 = vmatprep.subr.mxu0 0.0
    %162 = vmatpush1.msra.mxu0 0.0
    %163 = vmatprep.subr.mxu0 0.0
    %164 = vmatpush1.msra.mxu0 0.0
    %165 = vmatprep.subr.mxu0 0.0
    %166 = vmatpush1.msra.mxu0 0.0
    %167 = vmatprep.subr.mxu0 0.0
    %168 = vmatpush1.msra.mxu0 0.0
    %169 = vmatprep.subr.mxu0 0.0
    %170 = vmatpush1.msra.mxu0 0.0
    %171 = vmatprep.mubr.f32.mxu0 0.0
    %172 = vmatmul.mubr.f32.gmra.mrb[0].mxu0 %v105
    %v173 = vpop.f32.mrb[0].mxu0
    %v174 = vadd.f32 0.0, %v173
    %v175 = vpop.f32.mrb[0].mxu0
    %176 = vdwg.mxu0
    %v177 = vmul.f32 %v174, %v101
    %v178 = vld [vmem:[#allocation10] sm:$0x1]
    %v179 = vld [vmem:[#allocation8] sm:$0xff]
    %v180 = vld [vmem:[#allocation8 + $0x8] sm:$0xff]
    %v181 = vld [vmem:[#allocation8 + $0x10] sm:$0xff]
    %v182 = vld [vmem:[#allocation8 + $0x18] sm:$0xff]
    %v183 = vld [vmem:[#allocation8 + $0x20] sm:$0xff]
    %v184 = vld [vmem:[#allocation8 + $0x28] sm:$0xff]
    %v185 = vld [vmem:[#allocation8 + $0x30] sm:$0xff]
    %v186 = vld [vmem:[#allocation8 + $0x38] sm:$0xff]
    %v187 = vld [vmem:[#allocation8 + $0x40] sm:$0xff]
    %v188 = vld [vmem:[#allocation8 + $0x48] sm:$0xff]
    %v189 = vld [vmem:[#allocation8 + $0x50] sm:$0xff]
    %v190 = vld [vmem:[#allocation8 + $0x58] sm:$0xff]
    %v191 = vld [vmem:[#allocation8 + $0x60] sm:$0xff]
    %v192 = vld [vmem:[#allocation8 + $0x68] sm:$0xff]
    %v193 = vld [vmem:[#allocation8 + $0x70] sm:$0xff]
    %v194 = vld [vmem:[#allocation8 + $0x78] sm:$0xff]
    %v195 = vlaneseq
    %v196 = vshrl.u32 %v195, 7
    %v197 = vsub.s32 0, %v196
    %v198 = vrot.slane %v178, %v197
    %199 = vmatprep.subr.mxu0 0.0
    %200 = vmatpush1.msra.mxu0 %v179
    %201 = vmatprep.subr.mxu0 0.0
    %202 = vmatpush1.msra.mxu0 %v180
    %203 = vmatprep.subr.mxu0 0.0
    %204 = vmatpush1.msra.mxu0 %v181
    %205 = vmatprep.subr.mxu0 0.0
    %206 = vmatpush1.msra.mxu0 %v182
    %207 = vmatprep.subr.mxu0 0.0
    %208 = vmatpush1.msra.mxu0 %v183
    %209 = vmatprep.subr.mxu0 0.0
    %210 = vmatpush1.msra.mxu0 %v184
    %211 = vmatprep.subr.mxu0 0.0
    %212 = vmatpush1.msra.mxu0 %v185
    %213 = vmatprep.subr.mxu0 0.0
    %214 = vmatpush1.msra.mxu0 %v186
    %215 = vmatprep.subr.mxu0 0.0
    %216 = vmatpush1.msra.mxu0 %v187
    %217 = vmatprep.subr.mxu0 0.0
    %218 = vmatpush1.msra.mxu0 %v188
    %219 = vmatprep.subr.mxu0 0.0
    %220 = vmatpush1.msra.mxu0 %v189
    %221 = vmatprep.subr.mxu0 0.0
    %222 = vmatpush1.msra.mxu0 %v190
    %223 = vmatprep.subr.mxu0 0.0
    %224 = vmatpush1.msra.mxu0 %v191
    %225 = vmatprep.subr.mxu0 0.0
    %226 = vmatpush1.msra.mxu0 %v192
    %227 = vmatprep.subr.mxu0 0.0
    %228 = vmatpush1.msra.mxu0 %v193
    %229 = vmatprep.subr.mxu0 0.0
    %230 = vmatpush1.msra.mxu0 %v194
    %231 = vmatprep.subr.mxu0 0.0
    %232 = vmatpush1.msra.mxu0 0.0
    %233 = vmatprep.subr.mxu0 0.0
    %234 = vmatpush1.msra.mxu0 0.0
    %235 = vmatprep.subr.mxu0 0.0
    %236 = vmatpush1.msra.mxu0 0.0
    %237 = vmatprep.subr.mxu0 0.0
    %238 = vmatpush1.msra.mxu0 0.0
    %239 = vmatprep.subr.mxu0 0.0
    %240 = vmatpush1.msra.mxu0 0.0
    %241 = vmatprep.subr.mxu0 0.0
    %242 = vmatpush1.msra.mxu0 0.0
    %243 = vmatprep.subr.mxu0 0.0
    %244 = vmatpush1.msra.mxu0 0.0
    %245 = vmatprep.subr.mxu0 0.0
    %246 = vmatpush1.msra.mxu0 0.0
    %247 = vmatprep.subr.mxu0 0.0
    %248 = vmatpush1.msra.mxu0 0.0
    %249 = vmatprep.subr.mxu0 0.0
    %250 = vmatpush1.msra.mxu0 0.0
    %251 = vmatprep.subr.mxu0 0.0
    %252 = vmatpush1.msra.mxu0 0.0
    %253 = vmatprep.subr.mxu0 0.0
    %254 = vmatpush1.msra.mxu0 0.0
    %255 = vmatprep.subr.mxu0 0.0
    %256 = vmatpush1.msra.mxu0 0.0
    %257 = vmatprep.subr.mxu0 0.0
    %258 = vmatpush1.msra.mxu0 0.0
    %259 = vmatprep.subr.mxu0 0.0
    %260 = vmatpush1.msra.mxu0 0.0
    %261 = vmatprep.subr.mxu0 0.0
    %262 = vmatpush1.msra.mxu0 0.0
    %263 = vmatprep.mubr.f32.mxu0 0.0
    %264 = vmatmul.mubr.f32.gmra.mrb[0].mxu0 %v177
    %v265 = vpop.f32.mrb[0].mxu0
    %v266 = vadd.f32 %v198, %v265
    %v267 = vpop.f32.mrb[0].mxu0
    %268 = vdwg.mxu0
    %269 = vadd.xlane.f32.xlu0 %v266
    %v270 = vpop.xlane.xlu0 %269
    %v273 = vunpack.c.l.s4 839922192
    %v274 = vunpack.c.0.s8 %v273
    %v275 = vlaneseq
    %v276 = vshrl.u32 %v275, 7
    %v277 = vsub.s32 %v274, %v276
    %v278 = vrot.slane %v270, %v277
    %v280 = vunpack.c.l.s4 1985246804
    %v281 = vunpack.c.0.s8 %v280
    %v282 = vlaneseq
    %v283 = vshrl.u32 %v282, 7
    %v284 = vsub.s32 %v281, %v283
    %v285 = vrot.slane %v270, %v284
    %vm288 = vcmask 1043456
    %v289 = vsel %vm288, %v278, 0.0
    %v290 = vsel %vm288, %v285, 0.0
    %v291 = vadd.f32 %v289, %v290
    %v292 = vmul.f32 %v291, 0.00390625
    %v294 = vcombine.low %v292, %v292
    %v296 = vsub.f32 %v266, %v294
    %v297 = vmul.f32 %v296, %v296
    %298 = vadd.xlane.f32.xlu0 %v297
    %v299 = vpop.xlane.xlu0 %298
    %v302 = vunpack.c.l.s4 839922192
    %v303 = vunpack.c.0.s8 %v302
    %v304 = vlaneseq
    %v305 = vshrl.u32 %v304, 7
    %v306 = vsub.s32 %v303, %v305
    %v307 = vrot.slane %v299, %v306
    %v309 = vunpack.c.l.s4 1985246804
    %v310 = vunpack.c.0.s8 %v309
    %v311 = vlaneseq
    %v312 = vshrl.u32 %v311, 7
    %v313 = vsub.s32 %v310, %v312
    %v314 = vrot.slane %v299, %v313
    %v317 = vsel %vm288, %v307, 0.0
    %v318 = vsel %vm288, %v314, 0.0
    %v319 = vadd.f32 %v317, %v318
    %v320 = vmul.f32 %v319, 0.00390625
    %v321 = vld [vmem:[#allocation10 + $0x2] sm:$0xf]
    %v322 = vld [vmem:[#allocation10 + $0x6] sm:$0xf]
    %v323 = vadd.f32 %v320, 1e-05
    %v324 = vrsqrt.pop %v323
    %v325 = vmul.f32 %v321, %v324
    %327 = vset.pattern.permute.xlu0 0
    %328 = vperm.xlu0 %327, %v325
    %v329 = vpop.permute.xlu0 %328
    %v332 = vunpack.c.l.s4 839922192
    %v333 = vunpack.c.0.s8 %v332
    %v334 = vlaneseq
    %v335 = vshrl.u32 %v334, 7
    %v336 = vsub.s32 %v333, %v335
    %v337 = vrot.slane %v329, %v336
    %v339 = vcombine.low %v337, %v337
    %v341 = vmul.f32 %v296, %v339
    %343 = vset.pattern.permute.xlu0 0
    %344 = vperm.xlu0 %343, %v322
    %v345 = vpop.permute.xlu0 %344
    %v348 = vunpack.c.l.s4 839922192
    %v349 = vunpack.c.0.s8 %v348
    %v350 = vlaneseq
    %v351 = vshrl.u32 %v350, 7
    %v352 = vsub.s32 %v349, %v351
    %v353 = vrot.slane %v345, %v352
    %v355 = vcombine.low %v353, %v353
    %v357 = vadd.f32 %v341, %v355
    %v358 = vxor.u32 %v357, 2147483648
    %v359 = vmul.f32 %v358, 1.442695
    %v360 = vpow.pop %v359
    %v361 = vadd.f32 %v360, 1.0
    %v362 = vrcp.pop %v361
    %v363 = vmul.f32 1.0, %v362
    %364 = vadd.xlane.f32.xlu0 %v363
    %v365 = vpop.xlane.xlu0 %364
    %v366 = vmul.f32 %v365, 0.0078125
    %v369 = vunpack.c.l.s4 839922192
    %v370 = vunpack.c.0.s8 %v369
    %v371 = vlaneseq
    %v372 = vshrl.u32 %v371, 7
    %v373 = vsub.s32 %v370, %v372
    %v374 = vrot.slane %v366, %v373
    %v376 = vunpack.c.l.s4 1985246804
    %v377 = vunpack.c.0.s8 %v376
    %v378 = vlaneseq
    %v379 = vshrl.u32 %v378, 7
    %v380 = vsub.s32 %v377, %v379
    %v381 = vrot.slane %v366, %v380
    %v384 = vld [vmem:[#allocation7] sm:$0xff]
    %v385 = vld [vmem:[#allocation7 + $0x8] sm:$0xff]
    %v386 = vld [vmem:[#allocation7 + $0x10] sm:$0xff]
    %v387 = vld [vmem:[#allocation7 + $0x18] sm:$0xff]
    %v388 = vld [vmem:[#allocation7 + $0x20] sm:$0xff]
    %v389 = vld [vmem:[#allocation7 + $0x28] sm:$0xff]
    %v390 = vld [vmem:[#allocation7 + $0x30] sm:$0xff]
    %v391 = vld [vmem:[#allocation7 + $0x38] sm:$0xff]
    %v392 = vld [vmem:[#allocation7 + $0x40] sm:$0xff]
    %v393 = vld [vmem:[#allocation7 + $0x48] sm:$0xff]
    %v394 = vld [vmem:[#allocation7 + $0x50] sm:$0xff]
    %v395 = vld [vmem:[#allocation7 + $0x58] sm:$0xff]
    %v396 = vld [vmem:[#allocation7 + $0x60] sm:$0xff]
    %v397 = vld [vmem:[#allocation7 + $0x68] sm:$0xff]
    %v398 = vld [vmem:[#allocation7 + $0x70] sm:$0xff]
    %v399 = vld [vmem:[#allocation7 + $0x78] sm:$0xff]
    %v400 = vld [vmem:[#allocation7 + $0x80] sm:$0xff]
    %v401 = vld [vmem:[#allocation7 + $0x88] sm:$0xff]
    %v402 = vld [vmem:[#allocation7 + $0x90] sm:$0xff]
    %v403 = vld [vmem:[#allocation7 + $0x98] sm:$0xff]
    %v404 = vld [vmem:[#allocation7 + $0xa0] sm:$0xff]
    %v405 = vld [vmem:[#allocation7 + $0xa8] sm:$0xff]
    %v406 = vld [vmem:[#allocation7 + $0xb0] sm:$0xff]
    %v407 = vld [vmem:[#allocation7 + $0xb8] sm:$0xff]
    %v408 = vld [vmem:[#allocation7 + $0xc0] sm:$0xff]
    %v409 = vld [vmem:[#allocation7 + $0xc8] sm:$0xff]
    %v410 = vld [vmem:[#allocation7 + $0xd0] sm:$0xff]
    %v411 = vld [vmem:[#allocation7 + $0xd8] sm:$0xff]
    %v412 = vld [vmem:[#allocation7 + $0xe0] sm:$0xff]
    %v413 = vld [vmem:[#allocation7 + $0xe8] sm:$0xff]
    %v414 = vld [vmem:[#allocation7 + $0xf0] sm:$0xff]
    %v415 = vld [vmem:[#allocation7 + $0xf8] sm:$0xff]
    %v416 = vmul.f32 %v384, %v384
    %v417 = vmul.f32 %v385, %v385
    %v418 = vmul.f32 %v386, %v386
    %v419 = vmul.f32 %v387, %v387
    %v420 = vmul.f32 %v388, %v388
    %v421 = vmul.f32 %v389, %v389
    %v422 = vmul.f32 %v390, %v390
    %v423 = vmul.f32 %v391, %v391
    %v424 = vmul.f32 %v392, %v392
    %v425 = vmul.f32 %v393, %v393
    %v426 = vmul.f32 %v394, %v394
    %v427 = vmul.f32 %v395, %v395
    %v428 = vmul.f32 %v396, %v396
    %v429 = vmul.f32 %v397, %v397
    %v430 = vmul.f32 %v398, %v398
    %v431 = vmul.f32 %v399, %v399
    %v432 = vmul.f32 %v400, %v400
    %v433 = vmul.f32 %v401, %v401
    %v434 = vmul.f32 %v402, %v402
    %v435 = vmul.f32 %v403, %v403
    %v436 = vmul.f32 %v404, %v404
    %v437 = vmul.f32 %v405, %v405
    %v438 = vmul.f32 %v406, %v406
    %v439 = vmul.f32 %v407, %v407
    %v440 = vmul.f32 %v408, %v408
    %v441 = vmul.f32 %v409, %v409
    %v442 = vmul.f32 %v410, %v410
    %v443 = vmul.f32 %v411, %v411
    %v444 = vmul.f32 %v412, %v412
    %v445 = vmul.f32 %v413, %v413
    %v446 = vmul.f32 %v414, %v414
    %v447 = vmul.f32 %v415, %v415
    %v448 = vadd.f32 %v416, %v417
    %v449 = vadd.f32 %v448, %v418
    %v450 = vadd.f32 %v449, %v419
    %v451 = vadd.f32 %v450, %v420
    %v452 = vadd.f32 %v451, %v421
    %v453 = vadd.f32 %v452, %v422
    %v454 = vadd.f32 %v453, %v423
    %v455 = vadd.f32 %v454, %v424
    %v456 = vadd.f32 %v455, %v425
    %v457 = vadd.f32 %v456, %v426
    %v458 = vadd.f32 %v457, %v427
    %v459 = vadd.f32 %v458, %v428
    %v460 = vadd.f32 %v459, %v429
    %v461 = vadd.f32 %v460, %v430
    %v462 = vadd.f32 %v461, %v431
    %v463 = vrot.slane %v462, 4
    %v464 = vadd.f32 %v462, %v463
    %v465 = vrot.slane %v464, 2
    %v466 = vadd.f32 %v464, %v465
    %v467 = vrot.slane %v466, 1
    %v468 = vadd.f32 %v466, %v467
    %v469 = vadd.f32 %v432, %v433
    %v470 = vadd.f32 %v469, %v434
    %v471 = vadd.f32 %v470, %v435
    %v472 = vadd.f32 %v471, %v436
    %v473 = vadd.f32 %v472, %v437
    %v474 = vadd.f32 %v473, %v438
    %v475 = vadd.f32 %v474, %v439
    %v476 = vadd.f32 %v475, %v440
    %v477 = vadd.f32 %v476, %v441
    %v478 = vadd.f32 %v477, %v442
    %v479 = vadd.f32 %v478, %v443
    %v480 = vadd.f32 %v479, %v444
    %v481 = vadd.f32 %v480, %v445
    %v482 = vadd.f32 %v481, %v446
    %v483 = vadd.f32 %v482, %v447
    %v484 = vrot.slane %v483, 4
    %v485 = vadd.f32 %v483, %v484
    %v486 = vrot.slane %v485, 2
    %v487 = vadd.f32 %v485, %v486
    %v488 = vrot.slane %v487, 1
    %v489 = vadd.f32 %v487, %v488
    %v490 = vmul.f32 %v177, %v177
    %491 = vadd.xlane.f32.xlu0 %v490
    %v492 = vpop.xlane.xlu0 %491
    %v495 = vunpack.c.l.s4 839922192
    %v496 = vunpack.c.0.s8 %v495
    %v497 = vlaneseq
    %v498 = vshrl.u32 %v497, 7
    %v499 = vsub.s32 %v496, %v498
    %v500 = vrot.slane %v492, %v499
    %v502 = vunpack.c.l.s4 1985246804
    %v503 = vunpack.c.0.s8 %v502
    %v504 = vlaneseq
    %v505 = vshrl.u32 %v504, 7
    %v506 = vsub.s32 %v503, %v505
    %v507 = vrot.slane %v492, %v506
    %v511 = vcombine.high %v177, %v177
    %513 = vmatprep.subr.mxu0 0.0
    %514 = vmatpush1.msra.mxu0 %v384
    %515 = vmatprep.subr.mxu0 0.0
    %516 = vmatpush1.msra.mxu0 %v385
    %517 = vmatprep.subr.mxu0 0.0
    %518 = vmatpush1.msra.mxu0 %v386
    %519 = vmatprep.subr.mxu0 0.0
    %520 = vmatpush1.msra.mxu0 %v387
    %521 = vmatprep.subr.mxu0 0.0
    %522 = vmatpush1.msra.mxu0 %v388
    %523 = vmatprep.subr.mxu0 0.0
    %524 = vmatpush1.msra.mxu0 %v389
    %525 = vmatprep.subr.mxu0 0.0
    %526 = vmatpush1.msra.mxu0 %v390
    %527 = vmatprep.subr.mxu0 0.0
    %528 = vmatpush1.msra.mxu0 %v391
    %529 = vmatprep.subr.mxu0 0.0
    %530 = vmatpush1.msra.mxu0 %v392
    %531 = vmatprep.subr.mxu0 0.0
    %532 = vmatpush1.msra.mxu0 %v393
    %533 = vmatprep.subr.mxu0 0.0
    %534 = vmatpush1.msra.mxu0 %v394
    %535 = vmatprep.subr.mxu0 0.0
    %536 = vmatpush1.msra.mxu0 %v395
    %537 = vmatprep.subr.mxu0 0.0
    %538 = vmatpush1.msra.mxu0 %v396
    %539 = vmatprep.subr.mxu0 0.0
    %540 = vmatpush1.msra.mxu0 %v397
    %541 = vmatprep.subr.mxu0 0.0
    %542 = vmatpush1.msra.mxu0 %v398
    %543 = vmatprep.subr.mxu0 0.0
    %544 = vmatpush1.msra.mxu0 %v399
    %545 = vmatprep.subr.mxu0 0.0
    %546 = vmatpush1.msra.mxu0 0.0
    %547 = vmatprep.subr.mxu0 0.0
    %548 = vmatpush1.msra.mxu0 0.0
    %549 = vmatprep.subr.mxu0 0.0
    %550 = vmatpush1.msra.mxu0 0.0
    %551 = vmatprep.subr.mxu0 0.0
    %552 = vmatpush1.msra.mxu0 0.0
    %553 = vmatprep.subr.mxu0 0.0
    %554 = vmatpush1.msra.mxu0 0.0
    %555 = vmatprep.subr.mxu0 0.0
    %556 = vmatpush1.msra.mxu0 0.0
    %557 = vmatprep.subr.mxu0 0.0
    %558 = vmatpush1.msra.mxu0 0.0
    %559 = vmatprep.subr.mxu0 0.0
    %560 = vmatpush1.msra.mxu0 0.0
    %561 = vmatprep.subr.mxu0 0.0
    %562 = vmatpush1.msra.mxu0 0.0
    %563 = vmatprep.subr.mxu0 0.0
    %564 = vmatpush1.msra.mxu0 0.0
    %565 = vmatprep.subr.mxu0 0.0
    %566 = vmatpush1.msra.mxu0 0.0
    %567 = vmatprep.subr.mxu0 0.0
    %568 = vmatpush1.msra.mxu0 0.0
    %569 = vmatprep.subr.mxu0 0.0
    %570 = vmatpush1.msra.mxu0 0.0
    %571 = vmatprep.subr.mxu0 0.0
    %572 = vmatpush1.msra.mxu0 0.0
    %573 = vmatprep.subr.mxu0 0.0
    %574 = vmatpush1.msra.mxu0 0.0
    %575 = vmatprep.subr.mxu0 0.0
    %576 = vmatpush1.msra.mxu0 0.0
    %577 = vmatprep.mubr.f32.mxu0 0.0
    %578 = vmatmul.mubr.f32.gmra.mrb[0].mxu0 %v177
    %v579 = vpop.f32.mrb[0].mxu0
    %v580 = vadd.f32 0.0, %v579
    %v581 = vpop.f32.mrb[0].mxu0
    %582 = vdwg.mxu0
    %583 = vmatprep.subr.mxu0 0.0
    %584 = vmatpush1.msra.mxu0 %v400
    %585 = vmatprep.subr.mxu0 0.0
    %586 = vmatpush1.msra.mxu0 %v401
    %587 = vmatprep.subr.mxu0 0.0
    %588 = vmatpush1.msra.mxu0 %v402
    %589 = vmatprep.subr.mxu0 0.0
    %590 = vmatpush1.msra.mxu0 %v403
    %591 = vmatprep.subr.mxu0 0.0
    %592 = vmatpush1.msra.mxu0 %v404
    %593 = vmatprep.subr.mxu0 0.0
    %594 = vmatpush1.msra.mxu0 %v405
    %595 = vmatprep.subr.mxu0 0.0
    %596 = vmatpush1.msra.mxu0 %v406
    %597 = vmatprep.subr.mxu0 0.0
    %598 = vmatpush1.msra.mxu0 %v407
    %599 = vmatprep.subr.mxu0 0.0
    %600 = vmatpush1.msra.mxu0 %v408
    %601 = vmatprep.subr.mxu0 0.0
    %602 = vmatpush1.msra.mxu0 %v409
    %603 = vmatprep.subr.mxu0 0.0
    %604 = vmatpush1.msra.mxu0 %v410
    %605 = vmatprep.subr.mxu0 0.0
    %606 = vmatpush1.msra.mxu0 %v411
    %607 = vmatprep.subr.mxu0 0.0
    %608 = vmatpush1.msra.mxu0 %v412
    %609 = vmatprep.subr.mxu0 0.0
    %610 = vmatpush1.msra.mxu0 %v413
    %611 = vmatprep.subr.mxu0 0.0
    %612 = vmatpush1.msra.mxu0 %v414
    %613 = vmatprep.subr.mxu0 0.0
    %614 = vmatpush1.msra.mxu0 %v415
    %615 = vmatprep.subr.mxu0 0.0
    %616 = vmatpush1.msra.mxu0 0.0
    %617 = vmatprep.subr.mxu0 0.0
    %618 = vmatpush1.msra.mxu0 0.0
    %619 = vmatprep.subr.mxu0 0.0
    %620 = vmatpush1.msra.mxu0 0.0
    %621 = vmatprep.subr.mxu0 0.0
    %622 = vmatpush1.msra.mxu0 0.0
    %623 = vmatprep.subr.mxu0 0.0
    %624 = vmatpush1.msra.mxu0 0.0
    %625 = vmatprep.subr.mxu0 0.0
    %626 = vmatpush1.msra.mxu0 0.0
    %627 = vmatprep.subr.mxu0 0.0
    %628 = vmatpush1.msra.mxu0 0.0
    %629 = vmatprep.subr.mxu0 0.0
    %630 = vmatpush1.msra.mxu0 0.0
    %631 = vmatprep.subr.mxu0 0.0
    %632 = vmatpush1.msra.mxu0 0.0
    %633 = vmatprep.subr.mxu0 0.0
    %634 = vmatpush1.msra.mxu0 0.0
    %635 = vmatprep.subr.mxu0 0.0
    %636 = vmatpush1.msra.mxu0 0.0
    %637 = vmatprep.subr.mxu0 0.0
    %638 = vmatpush1.msra.mxu0 0.0
    %639 = vmatprep.subr.mxu0 0.0
    %640 = vmatpush1.msra.mxu0 0.0
    %641 = vmatprep.subr.mxu0 0.0
    %642 = vmatpush1.msra.mxu0 0.0
    %643 = vmatprep.subr.mxu0 0.0
    %644 = vmatpush1.msra.mxu0 0.0
    %645 = vmatprep.subr.mxu0 0.0
    %646 = vmatpush1.msra.mxu0 0.0
    %647 = vmatprep.mubr.f32.mxu0 0.0
    %648 = vmatmul.mubr.f32.gmra.mrb[0].mxu0 %v511
    %v649 = vpop.f32.mrb[0].mxu0
    %v650 = vadd.f32 0.0, %v649
    %v651 = vpop.f32.mrb[0].mxu0
    %652 = vdwg.mxu0
    %v653 = vadd.f32 %v500, %v468
    %v654 = vadd.f32 %v507, %v489
    %v655 = vmul.f32 %v580, 2.0
    %v656 = vmul.f32 %v650, 2.0
    %v657 = vsub.f32 %v653, %v655
    %v658 = vsub.f32 %v654, %v656
    %v659 = vmax.f32 %v657, 0.0
    %v660 = vmax.f32 %v658, 0.0
    %v661 = vmul.f32 %v659, 0.03125
    %v662 = vmul.f32 %v660, 0.03125
    %v663 = vsub.f32 %v661, %v374
    %v664 = vsub.f32 %v662, %v381
    %v665 = vmul.f32 %v663, 1.442695
    %v666 = vpow.pop %v665
    %v667 = vmul.f32 %v664, 1.442695
    %v668 = vpow.pop %v667
    %v669 = vld [vmem:[#allocation10 + $0x1] sm:$0x1]
    %s671 = vtos %v669
    %v672 = vstv %s671
    %v674 = vmul.f32 %v666, %v672
    %v675 = vmul.f32 %v668, %v672
    %676 = vst [vmem:[#allocation11] sm:$0xf] %v674
    %677 = vst [vmem:[#allocation11 + $0x4] sm:$0xf] %v675
    // Predicated region
    $region42: #{tpu_custom_call.1} parent=1 // pred_check
      _
    $region43: #{tpu_custom_call.1} parent=1 // pred_check_branch
      %679 = sbr.rel (0) target = $region45
    $region44: #{tpu_custom_call.1} parent=1 // pred_region
      %s681 = ssub.s32 128, 128
      %682 = vsyncadd [#allocation4], %s681
      %s683 = sshll.u32 [#allocation11], 4
      %s684 = int_to_ptr.vmem [resolvable:$true] %s683
      %689 = dma.vmem_to_hbm [thread:$0]  %s684, 128, %s5, [#allocation4], 64, 64, 4
    $region45: #{tpu_custom_call.1} parent=1 // pred_fallthru
      _
    // Predicated region
    $region46: #{tpu_custom_call.1} parent=1 // pred_check
      _
    $region47: #{tpu_custom_call.1} parent=1 // pred_check_branch
      %691 = sbr.rel (0) target = $region49
    $region48: #{tpu_custom_call.1} parent=1 // pred_region
      %692 = dma.done [#allocation4], 128
    $region49: #{tpu_custom_call.1} parent=1 // pred_fallthru
      _
    %693 = vsyncpa [#allocation3], 1
    %694 = vsyncpa [#allocation6], 1
    %695 = vsyncpa [#allocation9], 1
    %696 = vsyncpa [#allocation4], 1

</llo_original>
